<compile_context>
chip_gen: v6e
topology: v6e:2x2x1
jax: 0.10.0
libtpu: 0.0.40
codegen_flags: <defaults>
</compile_context>

<pallas_src>
import jax
import jax.numpy as jnp
from jax.experimental import pallas as pl
from jax.experimental.pallas import tpu as pltpu


# ----------------------------------------------------------------------------
# Tile-size helper: largest preferred tile that divides `total`, else full dim
# (a full-extent block is always legal under the (8,128) rule).
# ----------------------------------------------------------------------------
def _pick_tile(total, preferred=(512, 256, 128, 64, 32, 16, 8)):
    for t in preferred:
        if t <= total and total % t == 0:
            return t
    return total


# ----------------------------------------------------------------------------
# Tiled linear kernel:  y = x @ W + b     (rows x cols output tiling)
# ----------------------------------------------------------------------------
def _linear_kernel(x_ref, w_ref, b_ref, o_ref):
    acc = jnp.dot(x_ref[...], w_ref[...], preferred_element_type=jnp.float32)
    o_ref[...] = (acc + b_ref[...].astype(jnp.float32)).astype(o_ref.dtype)


def linear_pallas(x2d, w, b, *, vmem_limit_bytes):
    rows, d_in = x2d.shape
    d_out = w.shape[1]
    tr = _pick_tile(rows)                                   # row tile (sublane-legal)
    tc = _pick_tile(d_out, preferred=(1024, 512, 256, 128)) # col tile (lane-legal)
    b2 = b.reshape(1, d_out)
    return pl.pallas_call(
        _linear_kernel,
        out_shape=jax.ShapeDtypeStruct((rows, d_out), x2d.dtype),
        grid=(rows // tr, d_out // tc),
        in_specs=[
            pl.BlockSpec((tr, d_in), lambda r, c: (r, 0)),
            pl.BlockSpec((d_in, tc), lambda r, c: (0, c)),
            pl.BlockSpec((1, tc), lambda r, c: (0, c)),
        ],
        out_specs=pl.BlockSpec((tr, tc), lambda r, c: (r, c)),
        compiler_params=pltpu.CompilerParams(
            dimension_semantics=("parallel", "parallel"),
            vmem_limit_bytes=vmem_limit_bytes),
    )(x2d, w, b2)


# ----------------------------------------------------------------------------
# Flash-style attention kernel (online softmax over kv blocks).
#   q_ref : (H, tq, Hd)   kT_ref : (H, Hd, tk)   v_ref : (H, tk, Hd)
#   1/sqrt(head_dim) is already folded into Q in the wrapper.
# ----------------------------------------------------------------------------
def _flash_kernel(q_ref, kT_ref, v_ref, o_ref, m_sc, l_sc, acc_sc):
    kv = pl.program_id(2)

    @pl.when(kv == 0)
    def _init():
        m_sc[...] = jnp.full_like(m_sc[...], -jnp.inf)
        l_sc[...] = jnp.zeros_like(l_sc[...])
        acc_sc[...] = jnp.zeros_like(acc_sc[...])

    q = q_ref[...]                               # (H, tq, Hd)
    kT = kT_ref[...]                             # (H, Hd, tk) -- pre-transposed
    v = v_ref[...]                               # (H, tk, Hd)

    # All heads batched into one MXU dot_general (batch dim = H), f32 accum.
    # K arrives pre-transposed, so this is a plain batched matmul (no XLU work).
    s = jnp.einsum('hqd,hdk->hqk', q, kT,
                   preferred_element_type=jnp.float32)       # (H, tq, tk)

    m_prev = m_sc[...]
    m_new = jnp.maximum(m_prev, jnp.max(s, axis=-1, keepdims=True))
    alpha = jnp.exp(m_prev - m_new)
    p = jnp.exp(s - m_new)

    l_sc[...] = alpha * l_sc[...] + jnp.sum(p, axis=-1, keepdims=True)
    acc_sc[...] = alpha * acc_sc[...] + jnp.einsum(
        'hqk,hkd->hqd', p.astype(v.dtype), v,
        preferred_element_type=jnp.float32)
    m_sc[...] = m_new

    @pl.when(kv == pl.num_programs(2) - 1)
    def _finalize():
        # approx=True would route to the (otherwise idle) EUP slot; kept exact
        # so the strict fp32 correctness check below stays tight.
        inv_l = pl.reciprocal(l_sc[...], approx=False)
        o_ref[...] = (acc_sc[...] * inv_l).astype(o_ref.dtype)


def flash_attention_pallas(q, kT, v, *, vmem_limit_bytes):
    """q, v: (N, H, L, Hd) head-major; kT: (N, H, Hd, L) pre-transposed.
    1/sqrt(Hd) already folded into q."""
    N, H, L, Hd = q.shape
    tq = _pick_tile(L, preferred=(256, 128))
    tk = _pick_tile(L, preferred=(256, 128))
    # TODO(synk): add kv-position masking if tiles that do not divide L are
    # ever forced (the tile picker currently guarantees exact divisibility).
    return pl.pallas_call(
        _flash_kernel,
        out_shape=jax.ShapeDtypeStruct((N, H, L, Hd), q.dtype),
        grid=(N, L // tq, L // tk),
        in_specs=[
            pl.BlockSpec((None, H, tq, Hd), lambda n, qi, ki: (n, 0, qi, 0)),
            pl.BlockSpec((None, H, Hd, tk), lambda n, qi, ki: (n, 0, 0, ki)),
            pl.BlockSpec((None, H, tk, Hd), lambda n, qi, ki: (n, 0, ki, 0)),
        ],
        out_specs=pl.BlockSpec((None, H, tq, Hd), lambda n, qi, ki: (n, 0, qi, 0)),
        scratch_shapes=[
            pltpu.VMEM((H, tq, 1), jnp.float32),    # running max
            pltpu.VMEM((H, tq, 1), jnp.float32),    # running denom
            pltpu.VMEM((H, tq, Hd), jnp.float32),   # output accumulator
        ],
        compiler_params=pltpu.CompilerParams(
            dimension_semantics=("parallel", "parallel", "arbitrary"),
            vmem_limit_bytes=vmem_limit_bytes),
    )(q, kT, v)


# ----------------------------------------------------------------------------
# Full AattentionLayer forward.
# ----------------------------------------------------------------------------
def attention_layer_pallas(data, w_qkv, b_qkv, w_out, b_out,
                           num_heads: int, head_dim: int):
    """data: (N, L, D_in); weights stored as (in, out) so y = x @ W + b."""
    N, L, D_in = data.shape
    dim = num_heads * head_dim
    assert w_qkv.shape == (D_in, 3 * dim)
    out_dim = w_out.shape[1]
    # Conservative scoped-VMEM cap: within default limits on v6e/v7x, explicit
    # headroom on v5e; tiles above are sized far below it.
    vmem_limit = 32 * 1024 * 1024

    # Fold 1/sqrt(head_dim) into the Q columns of the projection (wrapper-side,
    # O(D_in*dim) instead of scaling the (H, L, L) scores in the kernel).
    scale = 1.0 / (head_dim ** 0.5)
    w_qkv_s = jnp.concatenate([w_qkv[:, :dim] * scale, w_qkv[:, dim:]], axis=1)
    b_qkv_s = jnp.concatenate([b_qkv[:dim] * scale, b_qkv[dim:]], axis=0)

    # QKV projection over a lane-dense (N*L, D_in) row slab.
    qkv = linear_pallas(data.reshape(N * L, D_in), w_qkv_s, b_qkv_s,
                        vmem_limit_bytes=vmem_limit)            # (N*L, 3*dim)
    qkv = qkv.reshape(N, L, 3 * dim)

    # Layout plumbing done in the wrapper (kept out of VMEM): head-major Q/V,
    # and K pre-transposed to (N, H, Hd, L) for an MXU-friendly QK^T.
    def to_heads(x):
        return x.reshape(N, L, num_heads, head_dim).transpose(0, 2, 1, 3)

    q = to_heads(qkv[:, :, :dim])                                 # (N, H, L, Hd)
    kT = qkv[:, :, dim:2 * dim].reshape(
        N, L, num_heads, head_dim).transpose(0, 2, 3, 1)          # (N, H, Hd, L)
    v = to_heads(qkv[:, :, 2 * dim:])                             # (N, H, L, Hd)

    o_heads = flash_attention_pallas(q, kT, v, vmem_limit_bytes=vmem_limit)

    # (N, H, L, Hd) -> (N*L, dim) relayout in the wrapper, then fc_out.
    o = o_heads.transpose(0, 2, 1, 3).reshape(N * L, dim)
    out = linear_pallas(o, w_out, b_out, vmem_limit_bytes=vmem_limit)
    return out.reshape(N, L, out_dim)


# ----------------------------------------------------------------------------
# Pure-JAX reference mirroring the PyTorch forward.
# ----------------------------------------------------------------------------
def attention_layer_ref(data, w_qkv, b_qkv, w_out, b_out,
                        num_heads: int, head_dim: int):
    N, L, _ = data.shape
    dim = num_heads * head_dim
    qkv = data @ w_qkv + b_qkv
    q = qkv[:, :, :dim].reshape(N, L, num_heads, head_dim)
    k = qkv[:, :, dim:2 * dim].reshape(N, L, num_heads, head_dim)
    v = qkv[:, :, 2 * dim:].reshape(N, L, num_heads, head_dim)
    scores = jnp.einsum('nqhd,nkhd->nhqk', q, k)
    attn = jax.nn.softmax(scores / head_dim ** 0.5, axis=3)
    out = jnp.einsum('nhql,nlhd->nqhd', attn, v).reshape(N, L, dim)
    return out @ w_out + b_out


if __name__ == "__main__":
    # Small, deterministic problem (matches the PyTorch module's hyperparams).
    N, L = 2, 8
    input_dim = 32
    num_heads, head_dim = 4, 8
    dim = num_heads * head_dim          # 32
    output_dim = 32

    key = jax.random.PRNGKey(0)
    k1, k2, k3, k4, k5 = jax.random.split(key, 5)

    data = jax.random.normal(k1, (N, L, input_dim), dtype=jnp.float32)
    # Parameters stored as (in, out) so the kernels do x @ W + b
    # (equivalent to PyTorch's x @ W.T + b with W = weight.T).
    w_qkv = jax.random.normal(k2, (input_dim, 3 * dim), dtype=jnp.float32) * 0.1
    b_qkv = jax.random.normal(k3, (3 * dim,), dtype=jnp.float32) * 0.1
    w_out = jax.random.normal(k4, (dim, output_dim), dtype=jnp.float32) * 0.1
    b_out = jax.random.normal(k5, (output_dim,), dtype=jnp.float32) * 0.1

    out = attention_layer_pallas(data, w_qkv, b_qkv, w_out, b_out,
                                 num_heads, head_dim)
    out = jax.block_until_ready(out)

    ref = attention_layer_ref(data, w_qkv, b_qkv, w_out, b_out,
                              num_heads, head_dim)
    assert out.shape == (N, L, output_dim)
    assert jnp.allclose(out, ref, atol=1e-4, rtol=1e-4), "mismatch vs JAX reference"

    print("KERNEL_OK")
</pallas_src>

<mosaic_0001>
module attributes {stable_mosaic.version = 11 : i64} {
  func.func @_linear_kernel(%arg0: i32, %arg1: i32, %arg2: memref<16x32xf32, #tpu.memory_space<vmem>>, %arg3: memref<32x96xf32, #tpu.memory_space<vmem>>, %arg4: memref<1x96xf32, #tpu.memory_space<vmem>>, %arg5: memref<16x96xf32, #tpu.memory_space<vmem>>) attributes {dimension_semantics = [#tpu.dimension_semantics<parallel>, #tpu.dimension_semantics<parallel>], iteration_bounds = array<i64: 1, 1>, scalar_prefetch = 0 : i64, scratch_operands = 0 : i64, tpu.core_type = #tpu.core_type<tc>, window_params = [{transform_indices = @transform_0, window_bounds = array<i64: 16, 32>}, {transform_indices = @transform_1, window_bounds = array<i64: 32, 96>}, {transform_indices = @transform_2, window_bounds = array<i64: 1, 96>}, {transform_indices = @transform_3, window_bounds = array<i64: 16, 96>}]} {
    %c0 = arith.constant 0 : index
    %c0_0 = arith.constant 0 : index
    %0 = vector.load %arg2[%c0, %c0_0] : memref<16x32xf32, #tpu.memory_space<vmem>>, vector<16x32xf32>
    %c0_1 = arith.constant 0 : index
    %c0_2 = arith.constant 0 : index
    %1 = vector.load %arg3[%c0_1, %c0_2] : memref<32x96xf32, #tpu.memory_space<vmem>>, vector<32x96xf32>
    %cst = arith.constant dense<0.000000e+00> : vector<16x96xf32>
    %2 = tpu.matmul %0, %1, %cst {dimension_numbers = #tpu.dot_dimension_numbers<[1], [0], [0], [1], [0, 0, 1, 1], [], []>} : vector<16x32xf32>, vector<32x96xf32>, vector<16x96xf32> -> vector<16x96xf32>
    %c0_3 = arith.constant 0 : index
    %c0_4 = arith.constant 0 : index
    %3 = vector.load %arg4[%c0_3, %c0_4] : memref<1x96xf32, #tpu.memory_space<vmem>>, vector<1x96xf32>
    %4 = vector.broadcast %3 : vector<1x96xf32> to vector<16x96xf32>
    %5 = arith.addf %2, %4 : vector<16x96xf32>
    %c0_5 = arith.constant 0 : index
    %c0_6 = arith.constant 0 : index
    %6 = vector.load %arg5[%c0_5, %c0_6] : memref<16x96xf32, #tpu.memory_space<vmem>>, vector<16x96xf32>
    tpu.vector_store %arg5[%c0_5, %c0_6], %5 {strides = array<i32>} : memref<16x96xf32, #tpu.memory_space<vmem>>, vector<16x96xf32>,
    return
  }
  func.func @transform_0(%arg0: i32, %arg1: i32) -> (i32, i32) {
    %c0_i32 = arith.constant 0 : i32
    %c0_i32_0 = arith.constant 0 : i32
    return %arg0, %c0_i32 : i32, i32
  }
  func.func @transform_1(%arg0: i32, %arg1: i32) -> (i32, i32) {
    %c0_i32 = arith.constant 0 : i32
    %c0_i32_0 = arith.constant 0 : i32
    return %c0_i32, %arg1 : i32, i32
  }
  func.func @transform_2(%arg0: i32, %arg1: i32) -> (i32, i32) {
    %c0_i32 = arith.constant 0 : i32
    %c0_i32_0 = arith.constant 0 : i32
    return %c0_i32, %arg1 : i32, i32
  }
  func.func @transform_3(%arg0: i32, %arg1: i32) -> (i32, i32) {
    %c0_i32 = arith.constant 0 : i32
    return %arg0, %arg1 : i32, i32
  }
}

</mosaic_0001>

<llo_original>
// kernel: tpu_custom_call.1
$region0: #{tpu_custom_call.1}
  #allocation0 [shape = 'u32[]', space=smem, size = 0x4, offset = 0x4, fixed_abs, tag = 'smem constant byte address 0x4 - core index']
  #allocation1 [shape = 'u32[144,128]{1,0:T(1,128)}', space=vmem, size = 0x12000, scoped, tag = 'internal scratch']
  %s0 = inlined_call_operand.hbm [shape: f32[16,32], index: 0, kind: input, shape index: {}]
  %s1 = inlined_call_operand.hbm [shape: f32[32,96], index: 1, kind: input, shape index: {}]
  %s2 = inlined_call_operand.vmem [shape: f32[1,96], index: 2, kind: input, shape index: {}]
  %s3 = inlined_call_operand.hbm [shape: f32[16,96], index: 3, kind: output, shape index: {}]
  %s4 = sld [smem:[#allocation0]]
  $region30: #{tpu_custom_call.1} parent=0
    _
  %s6 = ssub.s32 1, %s4
  %s7 = scalar_select 0, %s6, %s4
  $region1: #{tpu_custom_call.1} parent=0
    #allocation2 [shape = 'u8[8192]{0}', space=vmem, size = 0x2000, scoped, tag = 'input window, operand 0, single buffered']
    #allocation3 [shape = 's32[1]{0}', space=sflag, size = 0x4, scoped, tag = 'scoped memory for tpu_custom_call.1']
    #allocation4 [shape = 's32[1]{0}', space=sflag, size = 0x4, scoped, tag = 'scoped memory for tpu_custom_call.1']
    #allocation5 [shape = 'u8[16384]{0}', space=vmem, size = 0x4000, scoped, tag = 'input window, operand 1, single buffered']
    #allocation6 [shape = 's32[1]{0}', space=sflag, size = 0x4, scoped, tag = 'scoped memory for tpu_custom_call.1']
    #allocation7 [shape = 'u8[8192]{0}', space=vmem, size = 0x2000, scoped, tag = 'output window, operand 0, single buffered']
    %8 = vsyncpa [#allocation3], 0
    %9 = vsyncpa [#allocation6], 0
    %10 = vsyncpa [#allocation4], 0
    // Predicated region
    $region2: #{tpu_custom_call.1} parent=1 // pred_check
      _
    $region3: #{tpu_custom_call.1} parent=1 // pred_check_branch
      %12 = sbr.rel (0) target = $region5
    $region4: #{tpu_custom_call.1} parent=1 // pred_region
      %s14 = ssub.s32 256, 256
      %15 = vsyncadd [#allocation3], %s14
      %s16 = sshll.u32 [#allocation2], 4
      %s17 = int_to_ptr.vmem [resolvable:$true] %s16
      %22 = dma.hbm_to_vmem [thread:$0]  %s0, 256, %s17, [#allocation3], 128, 128, 8
    $region5: #{tpu_custom_call.1} parent=1 // pred_fallthru
      _
    // Predicated region
    $region6: #{tpu_custom_call.1} parent=1 // pred_check
      _
    $region7: #{tpu_custom_call.1} parent=1 // pred_check_branch
      %24 = sbr.rel (0) target = $region9
    $region8: #{tpu_custom_call.1} parent=1 // pred_region
      %s26 = ssub.s32 512, 512
      %27 = vsyncadd [#allocation6], %s26
      %s28 = sshll.u32 [#allocation5], 4
      %s29 = int_to_ptr.vmem [resolvable:$true] %s28
      %34 = dma.hbm_to_vmem [thread:$0]  %s1, 512, %s29, [#allocation6], 128, 128, 8
    $region9: #{tpu_custom_call.1} parent=1 // pred_fallthru
      _
    // Predicated region
    $region10: #{tpu_custom_call.1} parent=1 // pred_check
      _
    $region11: #{tpu_custom_call.1} parent=1 // pred_check_branch
      %36 = sbr.rel (0) target = $region13
    $region12: #{tpu_custom_call.1} parent=1 // pred_region
      _
    $region13: #{tpu_custom_call.1} parent=1 // pred_fallthru
      _
    // Predicated region
    $region14: #{tpu_custom_call.1} parent=1 // pred_check
      _
    $region15: #{tpu_custom_call.1} parent=1 // pred_check_branch
      %38 = sbr.rel (0) target = $region17
    $region16: #{tpu_custom_call.1} parent=1 // pred_region
      %39 = dma.done [#allocation3], 256
    $region17: #{tpu_custom_call.1} parent=1 // pred_fallthru
      _
    // Predicated region
    $region18: #{tpu_custom_call.1} parent=1 // pred_check
      _
    $region19: #{tpu_custom_call.1} parent=1 // pred_check_branch
      %41 = sbr.rel (0) target = $region21
    $region20: #{tpu_custom_call.1} parent=1 // pred_region
      %42 = dma.done [#allocation6], 512
    $region21: #{tpu_custom_call.1} parent=1 // pred_fallthru
      _
    %v43 = vld [vmem:[#allocation2] sm:$0xff]
    %v44 = vld [vmem:[#allocation2 + $0x8] sm:$0xff]
    %v45 = vld [vmem:[#allocation5] sm:$0xff]
    %v46 = vld [vmem:[#allocation5 + $0x8] sm:$0xff]
    %v47 = vld [vmem:[#allocation5 + $0x10] sm:$0xff]
    %v48 = vld [vmem:[#allocation5 + $0x18] sm:$0xff]
    %v49 = vld [vmem:[%s2] sm:$0x1]
    %v51 = vlaneseq
    %v52 = vshrl.u32 %v51, 7
    %v53 = vsub.s32 0, %v52
    %v54 = vrot.slane %v49, %v53
    %vm56 = vcmask 261120
    %v58 = vsel %vm56, %v43, 0
    %v61 = vsel %vm56, %v44, 0
    %63 = vmatprep.subr.mxu0 0.0
    %64 = vmatpush1.msra.mxu0 0.0
    %65 = vmatprep.subr.mxu0 0.0
    %66 = vmatpush1.msra.mxu0 0.0
    %67 = vmatprep.subr.mxu0 0.0
    %68 = vmatpush1.msra.mxu0 0.0
    %69 = vmatprep.subr.mxu0 0.0
    %70 = vmatpush1.msra.mxu0 0.0
    %71 = vmatprep.subr.mxu0 0.0
    %72 = vmatpush1.msra.mxu0 0.0
    %73 = vmatprep.subr.mxu0 0.0
    %74 = vmatpush1.msra.mxu0 0.0
    %75 = vmatprep.subr.mxu0 0.0
    %76 = vmatpush1.msra.mxu0 0.0
    %77 = vmatprep.subr.mxu0 0.0
    %78 = vmatpush1.msra.mxu0 0.0
    %79 = vmatprep.subr.mxu0 0.0
    %80 = vmatpush1.msra.mxu0 0.0
    %81 = vmatprep.subr.mxu0 0.0
    %82 = vmatpush1.msra.mxu0 0.0
    %83 = vmatprep.subr.mxu0 0.0
    %84 = vmatpush1.msra.mxu0 0.0
    %85 = vmatprep.subr.mxu0 0.0
    %86 = vmatpush1.msra.mxu0 0.0
    %87 = vmatprep.subr.mxu0 0.0
    %88 = vmatpush1.msra.mxu0 %v48
    %89 = vmatprep.subr.mxu0 0.0
    %90 = vmatpush1.msra.mxu0 %v47
    %91 = vmatprep.subr.mxu0 0.0
    %92 = vmatpush1.msra.mxu0 %v46
    %93 = vmatprep.subr.mxu0 0.0
    %94 = vmatpush1.msra.mxu0 %v45
    %95 = vmatprep.subr.mxu0 0.0
    %96 = vmatpush2.msra.mxu0 0.0
    %97 = vmatprep.subr.mxu0 0.0
    %98 = vmatpush2.msra.mxu0 0.0
    %99 = vmatprep.subr.mxu0 0.0
    %100 = vmatpush2.msra.mxu0 0.0
    %101 = vmatprep.subr.mxu0 0.0
    %102 = vmatpush2.msra.mxu0 0.0
    %103 = vmatprep.subr.mxu0 0.0
    %104 = vmatpush2.msra.mxu0 0.0
    %105 = vmatprep.subr.mxu0 0.0
    %106 = vmatpush2.msra.mxu0 0.0
    %107 = vmatprep.subr.mxu0 0.0
    %108 = vmatpush2.msra.mxu0 0.0
    %109 = vmatprep.subr.mxu0 0.0
    %110 = vmatpush2.msra.mxu0 0.0
    %111 = vmatprep.subr.mxu0 0.0
    %112 = vmatpush2.msra.mxu0 0.0
    %113 = vmatprep.subr.mxu0 0.0
    %114 = vmatpush2.msra.mxu0 0.0
    %115 = vmatprep.subr.mxu0 0.0
    %116 = vmatpush2.msra.mxu0 0.0
    %117 = vmatprep.subr.mxu0 0.0
    %118 = vmatpush2.msra.mxu0 0.0
    %119 = vmatprep.subr.mxu0 0.0
    %120 = vmatpush2.msra.mxu0 0.0
    %121 = vmatprep.subr.mxu0 0.0
    %122 = vmatpush2.msra.mxu0 0.0
    %123 = vmatprep.subr.mxu0 0.0
    %124 = vmatpush2.msra.mxu0 0.0
    %125 = vmatprep.subr.mxu0 0.0
    %126 = vmatpush2.msra.mxu0 0.0
    %127 = vmatprep.mubr.f32.mxu0 0.0
    %128 = vmatmul.mubr.f32.gmra.mxu0 %v58
    %v129 = vpop.f32.mrf.mxu0
    %v130 = vadd.f32 %v54, %v129
    %v131 = vpop.f32.mrf.mxu0
    %132 = vmatprep.mubr.f32.mxu0 0.0
    %133 = vmatmul.mubr.f32.gmra.mxu0 %v61
    %v134 = vpop.f32.mrf.mxu0
    %v135 = vadd.f32 %v54, %v134
    %v136 = vpop.f32.mrf.mxu0
    %137 = vdwg.mxu0
    %vm138 = vcmask 785408
    %139 = vst.msk [vmem:[#allocation7] sm:$0xff] %vm138, %v130
    %140 = vst.msk [vmem:[#allocation7 + $0x8] sm:$0xff] %vm138, %v135
    // Predicated region
    $region22: #{tpu_custom_call.1} parent=1 // pred_check
      _
    $region23: #{tpu_custom_call.1} parent=1 // pred_check_branch
      %142 = sbr.rel (0) target = $region25
    $region24: #{tpu_custom_call.1} parent=1 // pred_region
      %s144 = ssub.s32 256, 256
      %145 = vsyncadd [#allocation4], %s144
      %s146 = sshll.u32 [#allocation7], 4
      %s147 = int_to_ptr.vmem [resolvable:$true] %s146
      %152 = dma.vmem_to_hbm [thread:$0]  %s147, 256, %s3, [#allocation4], 128, 128, 8
    $region25: #{tpu_custom_call.1} parent=1 // pred_fallthru
      _
    // Predicated region
    $region26: #{tpu_custom_call.1} parent=1 // pred_check
      _
    $region27: #{tpu_custom_call.1} parent=1 // pred_check_branch
      %154 = sbr.rel (0) target = $region29
    $region28: #{tpu_custom_call.1} parent=1 // pred_region
      %155 = dma.done [#allocation4], 256
    $region29: #{tpu_custom_call.1} parent=1 // pred_fallthru
      _
    %156 = vsyncpa [#allocation3], 1
    %157 = vsyncpa [#allocation6], 1
    %158 = vsyncpa [#allocation4], 1

</llo_original>
